<compile_context>
chip_gen: v7x
topology: tpu7x:2x2x1
jax: 0.10.0
libtpu: 0.0.40
codegen_flags: <defaults>
</compile_context>

<pallas_src>
import functools

import jax
import jax.numpy as jnp
from jax.experimental import pallas as pl
from jax.experimental.pallas import tpu as pltpu

HIDDEN_DIM = 64
BN_EPS = 1e-5
LANE = 128      # f32 lane width
SUBLANE = 8     # f32 sublane width


def _round_up(n, m):
    return ((n + m - 1) // m) * m


# ---------------------------------------------------------------------------
# Kernel bodies
# ---------------------------------------------------------------------------
def _backbone(x, w1, b1, w2, b2):
    """Linear -> ReLU -> Linear -> ReLU (BatchNorm already folded into w1/b1)."""
    h1 = jnp.maximum(jnp.dot(x, w1, preferred_element_type=jnp.float32) + b1, 0.0)
    h2 = jnp.maximum(jnp.dot(h1, w2, preferred_element_type=jnp.float32) + b2, 0.0)
    return h2


def actor_discrete_kernel(action_dim, x_ref, w1_ref, b1_ref, w2_ref, b2_ref,
                          w3_ref, b3_ref, out_ref):
    """Discrete-action Actor tile: probs = softmax(MLP(x)), lane-padded to 128."""
    h = _backbone(x_ref[...], w1_ref[...], b1_ref[...], w2_ref[...], b2_ref[...])
    logits = jnp.dot(h, w3_ref[...], preferred_element_type=jnp.float32) + b3_ref[...]
    col = jax.lax.broadcasted_iota(jnp.int32, logits.shape, 1)
    valid = col < action_dim                       # mask lane padding
    logits = jnp.where(valid, logits, -jnp.inf)
    m = jnp.max(logits, axis=-1, keepdims=True)
    e = jnp.where(valid, jnp.exp(logits - m), 0.0)
    denom = jnp.sum(e, axis=-1, keepdims=True)
    out_ref[...] = e / denom                       # exact: rows sum to 1.0


def actor_continuous_kernel(x_ref, w1_ref, b1_ref, w2_ref, b2_ref,
                            w3_ref, b3_ref, ascale_ref, out_ref):
    """Continuous-action Actor tile (action_dim == 1), lane-padded to 128.

    Column 0 of the output tile = tanh(raw0) * action_scale,
    column 1 = softplus(raw1); remaining lanes are zero padding.
    """
    h = _backbone(x_ref[...], w1_ref[...], b1_ref[...], w2_ref[...], b2_ref[...])
    raw = jnp.dot(h, w3_ref[...], preferred_element_type=jnp.float32) + b3_ref[...]
    a_scale = ascale_ref[0]                       # SMEM scalar
    mu = jnp.tanh(raw) * a_scale                  # lane-wide; col 0 is the real mu
    sigma = jnp.logaddexp(0.0, raw)               # softplus; col 1 is the real sigma
    col = jax.lax.broadcasted_iota(jnp.int32, raw.shape, 1)
    out_ref[...] = jnp.where(col == 0, mu, jnp.where(col == 1, sigma, 0.0))


# ---------------------------------------------------------------------------
# Wrappers
# ---------------------------------------------------------------------------
def _fold_bn_into_linear(states, gamma, beta, w1, b1):
    """Training-mode BatchNorm1d (biased var) folded into the first Linear."""
    mean = jnp.mean(states, axis=0, keepdims=True)
    var = jnp.mean(jnp.square(states - mean), axis=0, keepdims=True)
    scale = gamma * jax.lax.rsqrt(var + BN_EPS)          # (1, S)
    shift = beta - mean * scale                          # (1, S)
    w1f = scale[0][:, None] * w1                         # (S, H)
    b1f = b1 + shift @ w1                                # (1, H)
    return w1f, b1f


def _pad_lanes(w, b, n_padded):
    """Zero-pad a head's [64, n] weight / [1, n] bias to n_padded output lanes."""
    n = w.shape[1]
    return (jnp.pad(w, ((0, 0), (0, n_padded - n))),
            jnp.pad(b, ((0, 0), (0, n_padded - n))))


def _pick_tile(batch, tb=None):
    """Batch tile: big enough to amortize per-step overhead, small enough that
    the parallel batch axis gets >=2 grid steps (v7x megacore) when possible."""
    bp8 = _round_up(max(batch, 1), SUBLANE)
    if tb is None:
        tb = min(bp8, 2048)
    tb = max(SUBLANE, _round_up(min(tb, bp8), SUBLANE))
    if bp8 >= 2 * SUBLANE:
        tb = min(tb, _round_up((bp8 + 1) // 2, SUBLANE))
    return tb


def _pad_batch(states, tb):
    b = states.shape[0]
    bp = _round_up(b, tb)
    if bp != b:
        states = jnp.pad(states, ((0, bp - b), (0, 0)))
    return states, b, bp


def _common_in_specs(tb, state_dim, n_out_padded):
    const = lambda i: (0, 0)
    return [
        pl.BlockSpec((tb, state_dim), lambda i: (i, 0)),          # states tile
        pl.BlockSpec((state_dim, HIDDEN_DIM), const),             # w1 (BN folded, resident)
        pl.BlockSpec((1, HIDDEN_DIM), const),                     # b1 (BN folded)
        pl.BlockSpec((HIDDEN_DIM, HIDDEN_DIM), const),            # w2 (resident)
        pl.BlockSpec((1, HIDDEN_DIM), const),                     # b2
        pl.BlockSpec((HIDDEN_DIM, n_out_padded), const),          # w3 lane-padded
        pl.BlockSpec((1, n_out_padded), const),                   # b3 lane-padded
    ]


def actor_forward_discrete(states, params, tb=None):
    """states: (B, state_dim) f32 -> action probabilities (B, action_dim) f32."""
    B, S = states.shape
    action_dim = params["w3"].shape[1]
    n_out = _round_up(action_dim, LANE)           # lane-dense head output width
    tb = _pick_tile(B, tb)
    w1f, b1f = _fold_bn_into_linear(states, params["gamma"], params["beta"],
                                    params["w1"], params["b1"])
    xs, B, Bp = _pad_batch(states, tb)
    w3p, b3p = _pad_lanes(params["w3"], params["b3"], n_out)

    out = pl.pallas_call(
        functools.partial(actor_discrete_kernel, action_dim),
        out_shape=jax.ShapeDtypeStruct((Bp, n_out), jnp.float32),
        grid=(Bp // tb,),
        in_specs=_common_in_specs(tb, S, n_out),
        out_specs=pl.BlockSpec((tb, n_out), lambda i: (i, 0)),
        compiler_params=pltpu.CompilerParams(dimension_semantics=("parallel",)),
    )(xs, w1f, b1f, params["w2"], params["b2"], w3p, b3p)
    return out[:B, :action_dim]


def actor_forward_continuous(states, params, action_scale, tb=None):
    """states: (B, state_dim) f32 -> (B, 1, 2) f32 = [tanh*scale, softplus]."""
    B, S = states.shape
    n_out = LANE                                   # 2*action_dim = 2, padded to 128
    tb = _pick_tile(B, tb)
    w1f, b1f = _fold_bn_into_linear(states, params["gamma"], params["beta"],
                                    params["w1"], params["b1"])
    xs, B, Bp = _pad_batch(states, tb)
    w3p, b3p = _pad_lanes(params["w3c"], params["b3c"], n_out)
    ascale = jnp.reshape(jnp.asarray(action_scale, jnp.float32), (1,))

    in_specs = _common_in_specs(tb, S, n_out) + [
        pl.BlockSpec(memory_space=pltpu.MemorySpace.SMEM),        # action_scale
    ]
    out = pl.pallas_call(
        actor_continuous_kernel,
        out_shape=jax.ShapeDtypeStruct((Bp, n_out), jnp.float32),
        grid=(Bp // tb,),
        in_specs=in_specs,
        out_specs=pl.BlockSpec((tb, n_out), lambda i: (i, 0)),
        compiler_params=pltpu.CompilerParams(dimension_semantics=("parallel",)),
    )(xs, w1f, b1f, params["w2"], params["b2"], w3p, b3p, ascale)
    # glue: view(B, action_dim=1, 2), matching outputs.view(B, action_dim, 2)
    return out[:B, :2].reshape(B, 1, 2)


# ---------------------------------------------------------------------------
# Pure-JAX reference (PyTorch-faithful, for correctness check)
# ---------------------------------------------------------------------------
def _ref_backbone(x, p):
    mean = jnp.mean(x, axis=0, keepdims=True)
    var = jnp.mean((x - mean) ** 2, axis=0, keepdims=True)
    xn = (x - mean) / jnp.sqrt(var + BN_EPS) * p["gamma"] + p["beta"]
    h1 = jnp.maximum(xn @ p["w1"] + p["b1"], 0.0)
    h2 = jnp.maximum(h1 @ p["w2"] + p["b2"], 0.0)
    return h2


def ref_discrete(x, p):
    logits = _ref_backbone(x, p) @ p["w3"] + p["b3"]
    return jax.nn.softmax(logits, axis=-1)


def ref_continuous(x, p, scale):
    raw = _ref_backbone(x, p) @ p["w3c"] + p["b3c"]
    raw = raw.reshape(raw.shape[0], 1, 2)
    return jnp.stack(
        (jnp.tanh(raw[..., 0]) * scale, jax.nn.softplus(raw[..., 1])), axis=-1)


# ---------------------------------------------------------------------------
# Deterministic parameter construction (shapes from Actor.__init__)
# ---------------------------------------------------------------------------
def make_params(key, state_dim, action_dim):
    ks = jax.random.split(key, 8)
    s = 0.1
    return {
        # BatchNorm1d(state_dim) affine params
        "gamma": jnp.ones((1, state_dim), jnp.float32),
        "beta": jnp.zeros((1, state_dim), jnp.float32),
        # Linear(state_dim, 64)
        "w1": (jax.random.normal(ks[0], (state_dim, HIDDEN_DIM)) * s).astype(jnp.float32),
        "b1": (jax.random.normal(ks[1], (1, HIDDEN_DIM)) * s).astype(jnp.float32),
        # Linear(64, 64)
        "w2": (jax.random.normal(ks[2], (HIDDEN_DIM, HIDDEN_DIM)) * s).astype(jnp.float32),
        "b2": (jax.random.normal(ks[3], (1, HIDDEN_DIM)) * s).astype(jnp.float32),
        # discrete head: Linear(64, action_dim)
        "w3": (jax.random.normal(ks[4], (HIDDEN_DIM, action_dim)) * s).astype(jnp.float32),
        "b3": (jax.random.normal(ks[5], (1, action_dim)) * s).astype(jnp.float32),
        # continuous head: Linear(64, action_dim*2) with action_dim == 1
        "w3c": (jax.random.normal(ks[6], (HIDDEN_DIM, 2)) * s).astype(jnp.float32),
        "b3c": (jax.random.normal(ks[7], (1, 2)) * s).astype(jnp.float32),
    }


if __name__ == "__main__":
    # TODO(synk): discrete-state configuration (Identity backbone + Embedding
    # lookup) and the `logit=True` early-return branch are not exercised here;
    # only the continuous-state Actor forward is built.
    B, STATE_DIM, ACTION_DIM = 20, 16, 4   # B=20 with TB=8 -> padded grid of 3 tiles
    ACTION_SCALE = 2.0                     # env.action_space.high[0]
    TB = 8                                 # small explicit tile to exercise the grid

    key = jax.random.PRNGKey(0)
    k_x, k_p = jax.random.split(key)
    states = jax.random.normal(k_x, (B, STATE_DIM), dtype=jnp.float32)
    params = make_params(k_p, STATE_DIM, ACTION_DIM)

    # Discrete-action Actor: softmax policy probabilities (explicit small tile).
    probs = jax.block_until_ready(actor_forward_discrete(states, params, tb=TB))
    probs_ref = ref_discrete(states, params)
    assert probs.shape == (B, ACTION_DIM)
    assert bool(jnp.all(jnp.isfinite(probs)))
    assert jnp.allclose(probs, probs_ref, atol=1e-4, rtol=1e-4)
    assert jnp.allclose(jnp.sum(probs, axis=-1), 1.0, atol=1e-5)

    # Same path with the auto-picked tile (>=2 grid steps -> 2 tiles of 16 rows).
    probs_auto = jax.block_until_ready(actor_forward_discrete(states, params))
    assert jnp.allclose(probs_auto, probs_ref, atol=1e-4, rtol=1e-4)
    assert jnp.allclose(jnp.sum(probs_auto, axis=-1), 1.0, atol=1e-5)

    # Continuous-action Actor (action_dim=1): (tanh*scale, softplus) pair.
    dist = jax.block_until_ready(
        actor_forward_continuous(states, params, ACTION_SCALE))
    dist_ref = ref_continuous(states, params, ACTION_SCALE)
    assert dist.shape == (B, 1, 2)
    assert bool(jnp.all(jnp.isfinite(dist)))
    assert jnp.allclose(dist, dist_ref, atol=1e-4, rtol=1e-4)

    print("KERNEL_OK")
</pallas_src>

<mosaic_0001>
module attributes {stable_mosaic.version = 11 : i64} {
  func.func @actor_discrete_kernel(%arg0: i32, %arg1: memref<8x16xf32, #tpu.memory_space<vmem>>, %arg2: memref<16x64xf32, #tpu.memory_space<vmem>>, %arg3: memref<1x64xf32, #tpu.memory_space<vmem>>, %arg4: memref<64x64xf32, #tpu.memory_space<vmem>>, %arg5: memref<1x64xf32, #tpu.memory_space<vmem>>, %arg6: memref<64x128xf32, #tpu.memory_space<vmem>>, %arg7: memref<1x128xf32, #tpu.memory_space<vmem>>, %arg8: memref<8x128xf32, #tpu.memory_space<vmem>>) attributes {dimension_semantics = [#tpu.dimension_semantics<parallel>], iteration_bounds = array<i64: 3>, scalar_prefetch = 0 : i64, scratch_operands = 0 : i64, tpu.core_type = #tpu.core_type<tc>, window_params = [{transform_indices = @transform_0, window_bounds = array<i64: 8, 16>}, {pipeline_mode = #tpu.pipeline_mode<synchronous>, transform_indices = @transform_1, window_bounds = array<i64: 16, 64>}, {pipeline_mode = #tpu.pipeline_mode<synchronous>, transform_indices = @transform_2, window_bounds = array<i64: 1, 64>}, {pipeline_mode = #tpu.pipeline_mode<synchronous>, transform_indices = @transform_3, window_bounds = array<i64: 64, 64>}, {pipeline_mode = #tpu.pipeline_mode<synchronous>, transform_indices = @transform_4, window_bounds = array<i64: 1, 64>}, {pipeline_mode = #tpu.pipeline_mode<synchronous>, transform_indices = @transform_5, window_bounds = array<i64: 64, 128>}, {pipeline_mode = #tpu.pipeline_mode<synchronous>, transform_indices = @transform_6, window_bounds = array<i64: 1, 128>}, {transform_indices = @transform_7, window_bounds = array<i64: 8, 128>}]} {
    %c0 = arith.constant 0 : index
    %c0_0 = arith.constant 0 : index
    %0 = vector.load %arg1[%c0, %c0_0] : memref<8x16xf32, #tpu.memory_space<vmem>>, vector<8x16xf32>
    %c0_1 = arith.constant 0 : index
    %c0_2 = arith.constant 0 : index
    %1 = vector.load %arg2[%c0_1, %c0_2] : memref<16x64xf32, #tpu.memory_space<vmem>>, vector<16x64xf32>
    %c0_3 = arith.constant 0 : index
    %c0_4 = arith.constant 0 : index
    %2 = vector.load %arg3[%c0_3, %c0_4] : memref<1x64xf32, #tpu.memory_space<vmem>>, vector<1x64xf32>
    %c0_5 = arith.constant 0 : index
    %c0_6 = arith.constant 0 : index
    %3 = vector.load %arg4[%c0_5, %c0_6] : memref<64x64xf32, #tpu.memory_space<vmem>>, vector<64x64xf32>
    %c0_7 = arith.constant 0 : index
    %c0_8 = arith.constant 0 : index
    %4 = vector.load %arg5[%c0_7, %c0_8] : memref<1x64xf32, #tpu.memory_space<vmem>>, vector<1x64xf32>
    %cst = arith.constant dense<0.000000e+00> : vector<8x64xf32>
    %5 = tpu.matmul %0, %1, %cst {dimension_numbers = #tpu.dot_dimension_numbers<[1], [0], [0], [1], [0, 0, 1, 1], [], []>} : vector<8x16xf32>, vector<16x64xf32>, vector<8x64xf32> -> vector<8x64xf32>
    %6 = vector.broadcast %2 : vector<1x64xf32> to vector<8x64xf32>
    %7 = arith.addf %5, %6 : vector<8x64xf32>
    %cst_9 = arith.constant 0.000000e+00 : f32
    %8 = vector.broadcast %cst_9 : f32 to vector<8x64xf32>
    %9 = arith.maximumf %7, %8 : vector<8x64xf32>
    %cst_10 = arith.constant dense<0.000000e+00> : vector<8x64xf32>
    %10 = tpu.matmul %9, %3, %cst_10 {dimension_numbers = #tpu.dot_dimension_numbers<[1], [0], [0], [1], [0, 0, 1, 1], [], []>} : vector<8x64xf32>, vector<64x64xf32>, vector<8x64xf32> -> vector<8x64xf32>
    %11 = vector.broadcast %4 : vector<1x64xf32> to vector<8x64xf32>
    %12 = arith.addf %10, %11 : vector<8x64xf32>
    %cst_11 = arith.constant 0.000000e+00 : f32
    %13 = vector.broadcast %cst_11 : f32 to vector<8x64xf32>
    %14 = arith.maximumf %12, %13 : vector<8x64xf32>
    %c0_12 = arith.constant 0 : index
    %c0_13 = arith.constant 0 : index
    %15 = vector.load %arg6[%c0_12, %c0_13] : memref<64x128xf32, #tpu.memory_space<vmem>>, vector<64x128xf32>
    %cst_14 = arith.constant dense<0.000000e+00> : vector<8x128xf32>
    %16 = tpu.matmul %14, %15, %cst_14 {dimension_numbers = #tpu.dot_dimension_numbers<[1], [0], [0], [1], [0, 0, 1, 1], [], []>} : vector<8x64xf32>, vector<64x128xf32>, vector<8x128xf32> -> vector<8x128xf32>
    %c0_15 = arith.constant 0 : index
    %c0_16 = arith.constant 0 : index
    %17 = vector.load %arg7[%c0_15, %c0_16] : memref<1x128xf32, #tpu.memory_space<vmem>>, vector<1x128xf32>
    %18 = vector.broadcast %17 : vector<1x128xf32> to vector<8x128xf32>
    %19 = arith.addf %16, %18 : vector<8x128xf32>
    %20 = tpu.iota {dimensions = array<i32: 1>} : vector<8x128xi32>
    %c4_i32 = arith.constant 4 : i32
    %21 = vector.broadcast %c4_i32 : i32 to vector<8x128xi32>
    %22 = arith.cmpi slt, %20, %21 : vector<8x128xi32>
    %cst_17 = arith.constant 0xFF800000 : f32
    %23 = vector.broadcast %cst_17 : f32 to vector<8x128xf32>
    %24 = arith.select %22, %19, %23 : vector<8x128xi1>, vector<8x128xf32>
    %cst_18 = arith.constant dense<0xFF800000> : vector<8xf32>
    %25 = vector.multi_reduction <maximumf>, %24, %cst_18 [1] : vector<8x128xf32> to vector<8xf32>
    %26 = vector.shape_cast %25 : vector<8xf32> to vector<8x1xf32>
    %27 = vector.broadcast %26 : vector<8x1xf32> to vector<8x128xf32>
    %28 = arith.subf %24, %27 : vector<8x128xf32>
    %29 = math.exp %28 : vector<8x128xf32>
    %cst_19 = arith.constant 0.000000e+00 : f32
    %30 = vector.broadcast %cst_19 : f32 to vector<8x128xf32>
    %31 = arith.select %22, %29, %30 : vector<8x128xi1>, vector<8x128xf32>
    %cst_20 = arith.constant dense<0.000000e+00> : vector<8xf32>
    %32 = vector.multi_reduction <add>, %31, %cst_20 [1] : vector<8x128xf32> to vector<8xf32>
    %33 = vector.shape_cast %32 : vector<8xf32> to vector<8x1xf32>
    %34 = vector.broadcast %33 : vector<8x1xf32> to vector<8x128xf32>
    %35 = arith.divf %31, %34 : vector<8x128xf32>
    %c0_21 = arith.constant 0 : index
    %c0_22 = arith.constant 0 : index
    %36 = vector.load %arg8[%c0_21, %c0_22] : memref<8x128xf32, #tpu.memory_space<vmem>>, vector<8x128xf32>
    tpu.vector_store %arg8[%c0_21, %c0_22], %35 {strides = array<i32>} : memref<8x128xf32, #tpu.memory_space<vmem>>, vector<8x128xf32>,
    return
  }
  func.func @transform_0(%arg0: i32) -> (i32, i32) {
    %c0_i32 = arith.constant 0 : i32
    %c0_i32_0 = arith.constant 0 : i32
    return %arg0, %c0_i32 : i32, i32
  }
  func.func @transform_1(%arg0: i32) -> (i32, i32) {
    %c0_i32 = arith.constant 0 : i32
    %c0_i32_0 = arith.constant 0 : i32
    %c0_i32_1 = arith.constant 0 : i32
    return %c0_i32, %c0_i32_0 : i32, i32
  }
  func.func @transform_2(%arg0: i32) -> (i32, i32) {
    %c0_i32 = arith.constant 0 : i32
    %c0_i32_0 = arith.constant 0 : i32
    %c0_i32_1 = arith.constant 0 : i32
    return %c0_i32, %c0_i32_0 : i32, i32
  }
  func.func @transform_3(%arg0: i32) -> (i32, i32) {
    %c0_i32 = arith.constant 0 : i32
    %c0_i32_0 = arith.constant 0 : i32
    %c0_i32_1 = arith.constant 0 : i32
    return %c0_i32, %c0_i32_0 : i32, i32
  }
  func.func @transform_4(%arg0: i32) -> (i32, i32) {
    %c0_i32 = arith.constant 0 : i32
    %c0_i32_0 = arith.constant 0 : i32
    %c0_i32_1 = arith.constant 0 : i32
    return %c0_i32, %c0_i32_0 : i32, i32
  }
  func.func @transform_5(%arg0: i32) -> (i32, i32) {
    %c0_i32 = arith.constant 0 : i32
    %c0_i32_0 = arith.constant 0 : i32
    %c0_i32_1 = arith.constant 0 : i32
    return %c0_i32, %c0_i32_0 : i32, i32
  }
  func.func @transform_6(%arg0: i32) -> (i32, i32) {
    %c0_i32 = arith.constant 0 : i32
    %c0_i32_0 = arith.constant 0 : i32
    %c0_i32_1 = arith.constant 0 : i32
    return %c0_i32, %c0_i32_0 : i32, i32
  }
  func.func @transform_7(%arg0: i32) -> (i32, i32) {
    %c0_i32 = arith.constant 0 : i32
    %c0_i32_0 = arith.constant 0 : i32
    return %arg0, %c0_i32 : i32, i32
  }
}

</mosaic_0001>

<llo_original>
// kernel: tpu_custom_call.1
$region0: #{tpu_custom_call.1}
  #allocation0 [shape = 'u32[]', space=smem, size = 0x4, offset = 0x4, fixed_abs, tag = 'smem constant byte address 0x4 - core index']
  #allocation1 [shape = 'u32[144,128]{1,0:T(1,128)}', space=vmem, size = 0x12000, scoped, tag = 'internal scratch']
  %s0 = inlined_call_operand.vmem [shape: f32[24,16], index: 0, kind: input, shape index: {}]
  %s1 = inlined_call_operand.vmem [shape: f32[16,64], index: 1, kind: input, shape index: {}]
  %s2 = inlined_call_operand.vmem [shape: f32[1,64], index: 2, kind: input, shape index: {}]
  %s3 = inlined_call_operand.hbm [shape: f32[64,64], index: 3, kind: input, shape index: {}]
  %s4 = inlined_call_operand.vmem [shape: f32[1,64], index: 4, kind: input, shape index: {}]
  %s5 = inlined_call_operand.hbm [shape: f32[64,128], index: 5, kind: input, shape index: {}]
  %s6 = inlined_call_operand.vmem [shape: f32[1,128], index: 6, kind: input, shape index: {}]
  %s7 = inlined_call_operand.hbm [shape: f32[24,128], index: 7, kind: output, shape index: {}]
  %s8 = sld [smem:[#allocation0]]
  $region69: #{tpu_custom_call.1} parent=0
    _
  %s10 = ssub.s32 1, %s8
  %s11 = scalar_select 0, %s10, %s8
  $region1: #{tpu_custom_call.1} parent=0
    #allocation2 [shape = 'u8[32768]{0}', space=vmem, size = 0x8000, scoped, tag = 'input window, operand 3, single buffered']
    #allocation3 [shape = 's32[2]{0}', space=sflag, size = 0x8, scoped, tag = 'scoped memory for tpu_custom_call.1']
    #allocation4 [shape = 's32[2]{0}', space=sflag, size = 0x8, scoped, tag = 'scoped memory for tpu_custom_call.1']
    #allocation5 [shape = 'u8[32768]{0}', space=vmem, size = 0x8000, scoped, tag = 'input window, operand 5, single buffered']
    #allocation6 [shape = 's32[1]{0}', space=sflag, size = 0x4, scoped, tag = 'scoped memory for tpu_custom_call.1']
    #allocation7 [shape = 'u8[8192]{0}', space=vmem, size = 0x2000, scoped, tag = 'output window, operand 0']
    %12 = vsyncpa [#allocation3], 0
    %13 = vsyncpa [#allocation6], 0
    %14 = vsyncpa [#allocation4], 0
    %s15 = scalar_lea.sflag [#allocation4], 1
    %16 = vsyncpa %s15, 0
    loop: start=0, step=1, limit=5
    $region2: #{tpu_custom_call.1} parent=1 // loop_pre_header
      _
    $region3: #{tpu_custom_call.1} parent=1 // loop_header
      %s18 = sphi 0, %s22
      %p19 = scmp.ge.s32.totalorder %s18, 5
      %s28 = sphi 0, %s30
      %s31 = sphi 0, %s28
      %s32 = sphi 0, %s31
      %s48 = sphi 0, %s32
      %s52 = sphi 0, %s52
      %s54 = sphi 0, %s52
      %s55 = sphi 0, %s54
      %s69 = sphi 0, %s55
      %s73 = sphi 0, %s73
      %s75 = sphi 0, %s73
      %s76 = sphi 0, %s75
      %s90 = sphi 0, %s76
      %s94 = sphi 0, %s94
      %s96 = sphi 0, %s94
      %s97 = sphi 0, %s96
      %s111 = sphi 0, %s97
      %s115 = sphi 0, %s115
      %s117 = sphi 0, %s115
      %s118 = sphi 0, %s117
      %s132 = sphi 0, %s118
      %s136 = sphi 0, %s136
      %s138 = sphi 0, %s136
      %s139 = sphi 0, %s138
      %s153 = sphi 0, %s139
      %s157 = sphi 0, %s157
      %s159 = sphi 0, %s157
      %s160 = sphi 0, %s159
      %s174 = sphi 0, %s160
      %s180 = sphi 0, %s182
      %s183 = sphi 0, %s180
      %s184 = sphi 0, %s183
      %s200 = sphi 0, %s184
    $region4: #{tpu_custom_call.1} parent=1 // loop_header_branch
      %21 = sbr.rel (%p19) target = $region8
    $region5: #{tpu_custom_call.1} parent=1 // loop_body
      %s23 = ssub.s32 %s18, 1
      %s24 = ssub.s32 %s18, 2
      %s25 = sadd.s32 %s18, 1
      %s26 = ssub.s32 %s18, %s25
      %p27 = scmp.eq.s32.totalorder %s26, 0
      %s29 = sadd.s32 %s28, 1
      %s30 = scalar_select %p27, %s28, %s29
      %p33 = pneg %p27
      %p34 = scmp.eq.s32.totalorder %s18, 2
      %p35 = por %p33, %p34
      %p36 = scmp.ne.s32.totalorder %s28, %s31
      %p37 = scmp.eq.s32.totalorder %s18, 0
      %p38 = por %p36, %p37
      %p39 = scmp.ne.s32.totalorder %s28, %s31
      %p40 = scmp.eq.s32.totalorder %s23, 2
      %p41 = por %p39, %p40
      %p42 = scmp.ne.s32.totalorder %s31, %s32
      %p43 = scmp.eq.s32.totalorder %s23, 0
      %p44 = por %p42, %p43
      %p45 = scmp.ne.s32.totalorder %s31, %s32
      %p46 = scmp.eq.s32.totalorder %s24, 2
      %p47 = por %p45, %p46
      %p49 = scmp.ne.s32.totalorder %s32, %s48
      %p50 = scmp.eq.s32.totalorder %s24, 0
      %p51 = por %p49, %p50
      %s53 = sadd.s32 %s52, 1
      %p56 = scmp.eq.s32.totalorder %s18, 2
      %p57 = scmp.ne.s32.totalorder %s52, %s54
      %p58 = scmp.eq.s32.totalorder %s18, 0
      %p59 = por %p57, %p58
      %p60 = scmp.ne.s32.totalorder %s52, %s54
      %p61 = scmp.eq.s32.totalorder %s23, 2
      %p62 = por %p60, %p61
      %p63 = scmp.ne.s32.totalorder %s54, %s55
      %p64 = scmp.eq.s32.totalorder %s23, 0
      %p65 = por %p63, %p64
      %p66 = scmp.ne.s32.totalorder %s54, %s55
      %p67 = scmp.eq.s32.totalorder %s24, 2
      %p68 = por %p66, %p67
      %p70 = scmp.ne.s32.totalorder %s55, %s69
      %p71 = scmp.eq.s32.totalorder %s24, 0
      %p72 = por %p70, %p71
      %s74 = sadd.s32 %s73, 1
      %p77 = scmp.eq.s32.totalorder %s18, 2
      %p78 = scmp.ne.s32.totalorder %s73, %s75
      %p79 = scmp.eq.s32.totalorder %s18, 0
      %p80 = por %p78, %p79
      %p81 = scmp.ne.s32.totalorder %s73, %s75
      %p82 = scmp.eq.s32.totalorder %s23, 2
      %p83 = por %p81, %p82
      %p84 = scmp.ne.s32.totalorder %s75, %s76
      %p85 = scmp.eq.s32.totalorder %s23, 0
      %p86 = por %p84, %p85
      %p87 = scmp.ne.s32.totalorder %s75, %s76
      %p88 = scmp.eq.s32.totalorder %s24, 2
      %p89 = por %p87, %p88
      %p91 = scmp.ne.s32.totalorder %s76, %s90
      %p92 = scmp.eq.s32.totalorder %s24, 0
      %p93 = por %p91, %p92
      %s95 = sadd.s32 %s94, 1
      %p98 = scmp.eq.s32.totalorder %s18, 2
      %p99 = scmp.ne.s32.totalorder %s94, %s96
      %p100 = scmp.eq.s32.totalorder %s18, 0
      %p101 = por %p99, %p100
      %p102 = scmp.ne.s32.totalorder %s94, %s96
      %p103 = scmp.eq.s32.totalorder %s23, 2
      %p104 = por %p102, %p103
      %p105 = scmp.ne.s32.totalorder %s96, %s97
      %p106 = scmp.eq.s32.totalorder %s23, 0
      %p107 = por %p105, %p106
      %p108 = scmp.ne.s32.totalorder %s96, %s97
      %p109 = scmp.eq.s32.totalorder %s24, 2
      %p110 = por %p108, %p109
      %p112 = scmp.ne.s32.totalorder %s97, %s111
      %p113 = scmp.eq.s32.totalorder %s24, 0
      %p114 = por %p112, %p113
      %s116 = sadd.s32 %s115, 1
      %p119 = scmp.eq.s32.totalorder %s18, 2
      %p120 = scmp.ne.s32.totalorder %s115, %s117
      %p121 = scmp.eq.s32.totalorder %s18, 0
      %p122 = por %p120, %p121
      %p123 = scmp.ne.s32.totalorder %s115, %s117
      %p124 = scmp.eq.s32.totalorder %s23, 2
      %p125 = por %p123, %p124
      %p126 = scmp.ne.s32.totalorder %s117, %s118
      %p127 = scmp.eq.s32.totalorder %s23, 0
      %p128 = por %p126, %p127
      %p129 = scmp.ne.s32.totalorder %s117, %s118
      %p130 = scmp.eq.s32.totalorder %s24, 2
      %p131 = por %p129, %p130
      %p133 = scmp.ne.s32.totalorder %s118, %s132
      %p134 = scmp.eq.s32.totalorder %s24, 0
      %p135 = por %p133, %p134
      %s137 = sadd.s32 %s136, 1
      %p140 = scmp.eq.s32.totalorder %s18, 2
      %p141 = scmp.ne.s32.totalorder %s136, %s138
      %p142 = scmp.eq.s32.totalorder %s18, 0
      %p143 = por %p141, %p142
      %p144 = scmp.ne.s32.totalorder %s136, %s138
      %p145 = scmp.eq.s32.totalorder %s23, 2
      %p146 = por %p144, %p145
      %p147 = scmp.ne.s32.totalorder %s138, %s139
      %p148 = scmp.eq.s32.totalorder %s23, 0
      %p149 = por %p147, %p148
      %p150 = scmp.ne.s32.totalorder %s138, %s139
      %p151 = scmp.eq.s32.totalorder %s24, 2
      %p152 = por %p150, %p151
      %p154 = scmp.ne.s32.totalorder %s139, %s153
      %p155 = scmp.eq.s32.totalorder %s24, 0
      %p156 = por %p154, %p155
      %s158 = sadd.s32 %s157, 1
      %p161 = scmp.eq.s32.totalorder %s18, 2
      %p162 = scmp.ne.s32.totalorder %s157, %s159
      %p163 = scmp.eq.s32.totalorder %s18, 0
      %p164 = por %p162, %p163
      %p165 = scmp.ne.s32.totalorder %s157, %s159
      %p166 = scmp.eq.s32.totalorder %s23, 2
      %p167 = por %p165, %p166
      %p168 = scmp.ne.s32.totalorder %s159, %s160
      %p169 = scmp.eq.s32.totalorder %s23, 0
      %p170 = por %p168, %p169
      %p171 = scmp.ne.s32.totalorder %s159, %s160
      %p172 = scmp.eq.s32.totalorder %s24, 2
      %p173 = por %p171, %p172
      %p175 = scmp.ne.s32.totalorder %s160, %s174
      %p176 = scmp.eq.s32.totalorder %s24, 0
      %p177 = por %p175, %p176
      %s178 = ssub.s32 %s18, %s25
      %p179 = scmp.eq.s32.totalorder %s178, 0
      %s181 = sadd.s32 %s180, 1
      %s182 = scalar_select %p179, %s180, %s181
      %p185 = pneg %p179
      %p186 = scmp.eq.s32.totalorder %s18, 2
      %p187 = por %p185, %p186
      %p188 = scmp.ne.s32.totalorder %s180, %s183
      %p189 = scmp.eq.s32.totalorder %s18, 0
      %p190 = por %p188, %p189
      %p191 = scmp.ne.s32.totalorder %s180, %s183
      %p192 = scmp.eq.s32.totalorder %s23, 2
      %p193 = por %p191, %p192
      %p194 = scmp.ne.s32.totalorder %s183, %s184
      %p195 = scmp.eq.s32.totalorder %s23, 0
      %p196 = por %p194, %p195
      %p197 = scmp.ne.s32.totalorder %s183, %s184
      %p198 = scmp.eq.s32.totalorder %s24, 2
      %p199 = por %p197, %p198
      %p201 = scmp.ne.s32.totalorder %s184, %s200
      %p202 = scmp.eq.s32.totalorder %s24, 0
      %p203 = por %p201, %p202
      %p204 = scmp.le.s32.totalorder 1, %s18
      %p205 = scmp.lt.s32.totalorder %s18, 4
      %p206 = pnand %p204, %p205
      %p207 = pneg %p206
      // Predicated region
      $region9: #{tpu_custom_call.1} parent=5 // pred_check
        _
      $region10: #{tpu_custom_call.1} parent=5 // pred_check_branch
        %209 = sbr.rel (%p206) target = $region12
      $region11: #{tpu_custom_call.1} parent=5 // pred_region
        %s210 = ssub.s32 %s18, 1
        // Predicated region
        $region13: #{tpu_custom_call.1} parent=11 // pred_check
          %p211 = pneg %p65
        $region14: #{tpu_custom_call.1} parent=11 // pred_check_branch
          %213 = sbr.rel (%p211) target = $region16
        $region15: #{tpu_custom_call.1} parent=11 // pred_region
          _
        $region16: #{tpu_custom_call.1} parent=11 // pred_fallthru
          _
        // Predicated region
        $region17: #{tpu_custom_call.1} parent=11 // pred_check
          %p214 = pneg %p86
        $region18: #{tpu_custom_call.1} parent=11 // pred_check_branch
          %216 = sbr.rel (%p214) target = $region20
        $region19: #{tpu_custom_call.1} parent=11 // pred_region
          _
        $region20: #{tpu_custom_call.1} parent=11 // pred_fallthru
          _
        // Predicated region
        $region21: #{tpu_custom_call.1} parent=11 // pred_check
          %p217 = pneg %p107
        $region22: #{tpu_custom_call.1} parent=11 // pred_check_branch
          %219 = sbr.rel (%p217) target = $region24
        $region23: #{tpu_custom_call.1} parent=11 // pred_region
          %s221 = ssub.s32 1024, 1024
          %222 = vsyncadd [#allocation3], %s221
          %s223 = sshll.u32 [#allocation2], 4
          %s224 = int_to_ptr.vmem [resolvable:$true] %s223
          %229 = dma.hbm_to_vmem [thread:$0]  %s3, 1024, %s224, [#allocation3], 128, 128, 8
        $region24: #{tpu_custom_call.1} parent=11 // pred_fallthru
          _
        // Predicated region
        $region25: #{tpu_custom_call.1} parent=11 // pred_check
          %p230 = pneg %p128
        $region26: #{tpu_custom_call.1} parent=11 // pred_check_branch
          %232 = sbr.rel (%p230) target = $region28
        $region27: #{tpu_custom_call.1} parent=11 // pred_region
          _
        $region28: #{tpu_custom_call.1} parent=11 // pred_fallthru
          _
        // Predicated region
        $region29: #{tpu_custom_call.1} parent=11 // pred_check
          %p233 = pneg %p149
        $region30: #{tpu_custom_call.1} parent=11 // pred_check_branch
          %235 = sbr.rel (%p233) target = $region32
        $region31: #{tpu_custom_call.1} parent=11 // pred_region
          %s237 = ssub.s32 1024, 1024
          %238 = vsyncadd [#allocation6], %s237
          %s239 = sshll.u32 [#allocation5], 4
          %s240 = int_to_ptr.vmem [resolvable:$true] %s239
          %245 = dma.hbm_to_vmem [thread:$0]  %s5, 1024, %s240, [#allocation6], 128, 128, 8
        $region32: #{tpu_custom_call.1} parent=11 // pred_fallthru
          _
        // Predicated region
        $region33: #{tpu_custom_call.1} parent=11 // pred_check
          %p246 = pneg %p170
        $region34: #{tpu_custom_call.1} parent=11 // pred_check_branch
          %248 = sbr.rel (%p246) target = $region36
        $region35: #{tpu_custom_call.1} parent=11 // pred_region
          _
        $region36: #{tpu_custom_call.1} parent=11 // pred_fallthru
          _
      $region12: #{tpu_custom_call.1} parent=5 // pred_fallthru
        _
      %p249 = scmp.lt.s32.totalorder %s18, 3
      // Predicated region
      $region37: #{tpu_custom_call.1} parent=5 // pred_check
        %p250 = pneg %p249
      $region38: #{tpu_custom_call.1} parent=5 // pred_check_branch
        %252 = sbr.rel (%p250) target = $region40
      $region39: #{tpu_custom_call.1} parent=5 // pred_region
        // Predicated region
        $region41: #{tpu_custom_call.1} parent=39 // pred_check
          %p253 = pneg %p38
        $region42: #{tpu_custom_call.1} parent=39 // pred_check_branch
          %255 = sbr.rel (%p253) target = $region44
        $region43: #{tpu_custom_call.1} parent=39 // pred_region
          %p256 = scmp.lt.s32.totalorder %s18, 2
          %s257 = scalar_select %p256, %s18, 2
          %s258 = smul.addr %s257, 8
          %s259 = scalar_lea.vmem %s0, %s258
        $region44: #{tpu_custom_call.1} parent=39 // pred_fallthru
          _
      $region40: #{tpu_custom_call.1} parent=5 // pred_fallthru
        _
      %p260 = scmp.le.s32.totalorder 1, %s18
      %p261 = scmp.lt.s32.totalorder %s18, 4
      %p262 = pnand %p260, %p261
      %p263 = pneg %p262
      // Predicated region
      $region45: #{tpu_custom_call.1} parent=5 // pred_check
        _
      $region46: #{tpu_custom_call.1} parent=5 // pred_check_branch
        %265 = sbr.rel (%p262) target = $region48
      $region47: #{tpu_custom_call.1} parent=5 // pred_region
        %s266 = ssub.s32 %s18, 1
        // Predicated region
        $region49: #{tpu_custom_call.1} parent=47 // pred_check
          %p267 = pneg %p107
        $region50: #{tpu_custom_call.1} parent=47 // pred_check_branch
          %269 = sbr.rel (%p267) target = $region52
        $region51: #{tpu_custom_call.1} parent=47 // pred_region
          %270 = dma.done [#allocation3], 1024
        $region52: #{tpu_custom_call.1} parent=47 // pred_fallthru
          _
        // Predicated region
        $region53: #{tpu_custom_call.1} parent=47 // pred_check
          %p271 = pneg %p149
        $region54: #{tpu_custom_call.1} parent=47 // pred_check_branch
          %273 = sbr.rel (%p271) target = $region56
        $region55: #{tpu_custom_call.1} parent=47 // pred_region
          %274 = dma.done [#allocation6], 1024
        $region56: #{tpu_custom_call.1} parent=47 // pred_fallthru
          _
        %p275 = scmp.lt.s32.totalorder %s23, 2
        %s276 = scalar_select %p275, %s23, 2
        %s277 = smul.addr %s276, 8
        %s278 = scalar_lea.vmem %s0, %s277
        %p279 = pneg %p44
        %p280 = pneg %p41
        %p281 = pneg %p65
        %p282 = pneg %p62
        %p283 = pneg %p86
        %p284 = pneg %p83
        %p285 = pneg %p107
        %p286 = pneg %p104
        %p287 = pneg %p128
        %p288 = pneg %p125
        %p289 = pneg %p149
        %p290 = pneg %p146
        %p291 = pneg %p170
        %p292 = pneg %p167
        %p293 = pneg %p196
        %p294 = pneg %p193
        %s295 = sand.u32 %s183, 1
        %s296 = scalar_lea.sflag [#allocation4], %s295
        %s297 = sand.u32 %s183, 1
        %s298 = smul.addr %s297, 8
        %s299 = scalar_lea.vmem [#allocation7], %s298
        %p300 = scmp.lt.s32.totalorder %s23, 2
        %s301 = scalar_select %p300, %s23, 2
        %s302 = smul.addr %s301, 8
        %s303 = scalar_lea.vmem %s0, %s302
        %v304 = vld [vmem:[%s303] sm:$0xff]
        %v305 = vld [vmem:[%s1] sm:$0xff]
        %v306 = vld [vmem:[%s1 + $0x8] sm:$0xff]
        %v307 = vld [vmem:[%s2] sm:$0x1]
        %v308 = vld [vmem:[#allocation2] sm:$0xff]
        %v309 = vld [vmem:[#allocation2 + $0x8] sm:$0xff]
        %v310 = vld [vmem:[#allocation2 + $0x10] sm:$0xff]
        %v311 = vld [vmem:[#allocation2 + $0x18] sm:$0xff]
        %v312 = vld [vmem:[#allocation2 + $0x20] sm:$0xff]
        %v313 = vld [vmem:[#allocation2 + $0x28] sm:$0xff]
        %v314 = vld [vmem:[#allocation2 + $0x30] sm:$0xff]
        %v315 = vld [vmem:[#allocation2 + $0x38] sm:$0xff]
        %v316 = vld [vmem:[%s4] sm:$0x1]
        %v318 = vlaneseq
        %v319 = vshrl.u32 %v318, 7
        %v320 = vsub.s32 0, %v319
        %v321 = vrot.slane %v307, %v320
        %vm323 = vcmask 130048
        %v325 = vsel %vm323, %v304, 0
        %327 = vmatprep.subr.mxu0 0.0
        %328 = vmatpush1.msra.mxu0 %v305
        %329 = vmatprep.subr.mxu0 0.0
        %330 = vmatpush1.msra.mxu0 %v306
        %331 = vmatprep.subr.mxu0 0.0
        %332 = vmatpush1.msra.mxu0 0.0
        %333 = vmatprep.subr.mxu0 0.0
        %334 = vmatpush1.msra.mxu0 0.0
        %335 = vmatprep.subr.mxu0 0.0
        %336 = vmatpush1.msra.mxu0 0.0
        %337 = vmatprep.subr.mxu0 0.0
        %338 = vmatpush1.msra.mxu0 0.0
        %339 = vmatprep.subr.mxu0 0.0
        %340 = vmatpush1.msra.mxu0 0.0
        %341 = vmatprep.subr.mxu0 0.0
        %342 = vmatpush1.msra.mxu0 0.0
        %343 = vmatprep.subr.mxu0 0.0
        %344 = vmatpush1.msra.mxu0 0.0
        %345 = vmatprep.subr.mxu0 0.0
        %346 = vmatpush1.msra.mxu0 0.0
        %347 = vmatprep.subr.mxu0 0.0
        %348 = vmatpush1.msra.mxu0 0.0
        %349 = vmatprep.subr.mxu0 0.0
        %350 = vmatpush1.msra.mxu0 0.0
        %351 = vmatprep.subr.mxu0 0.0
        %352 = vmatpush1.msra.mxu0 0.0
        %353 = vmatprep.subr.mxu0 0.0
        %354 = vmatpush1.msra.mxu0 0.0
        %355 = vmatprep.subr.mxu0 0.0
        %356 = vmatpush1.msra.mxu0 0.0
        %357 = vmatprep.subr.mxu0 0.0
        %358 = vmatpush1.msra.mxu0 0.0
        %359 = vmatprep.subr.mxu0 0.0
        %360 = vmatpush1.msra.mxu0 0.0
        %361 = vmatprep.subr.mxu0 0.0
        %362 = vmatpush1.msra.mxu0 0.0
        %363 = vmatprep.subr.mxu0 0.0
        %364 = vmatpush1.msra.mxu0 0.0
        %365 = vmatprep.subr.mxu0 0.0
        %366 = vmatpush1.msra.mxu0 0.0
        %367 = vmatprep.subr.mxu0 0.0
        %368 = vmatpush1.msra.mxu0 0.0
        %369 = vmatprep.subr.mxu0 0.0
        %370 = vmatpush1.msra.mxu0 0.0
        %371 = vmatprep.subr.mxu0 0.0
        %372 = vmatpush1.msra.mxu0 0.0
        %373 = vmatprep.subr.mxu0 0.0
        %374 = vmatpush1.msra.mxu0 0.0
        %375 = vmatprep.subr.mxu0 0.0
        %376 = vmatpush1.msra.mxu0 0.0
        %377 = vmatprep.subr.mxu0 0.0
        %378 = vmatpush1.msra.mxu0 0.0
        %379 = vmatprep.subr.mxu0 0.0
        %380 = vmatpush1.msra.mxu0 0.0
        %381 = vmatprep.subr.mxu0 0.0
        %382 = vmatpush1.msra.mxu0 0.0
        %383 = vmatprep.subr.mxu0 0.0
        %384 = vmatpush1.msra.mxu0 0.0
        %385 = vmatprep.subr.mxu0 0.0
        %386 = vmatpush1.msra.mxu0 0.0
        %387 = vmatprep.subr.mxu0 0.0
        %388 = vmatpush1.msra.mxu0 0.0
        %389 = vmatprep.subr.mxu0 0.0
        %390 = vmatpush1.msra.mxu0 0.0
        %391 = vmatprep.mubr.f32.mxu0 0.0
        %392 = vmatmul.mubr.f32.gmra.mrb[0].mxu0 %v325
        %v393 = vpop.f32.mrb[0].mxu0
        %v394 = vadd.f32 %v321, %v393
        %v395 = vpop.f32.mrb[0].mxu0
        %396 = vdwg.mxu0
        %v397 = vmax.f32 %v394, 0.0
        %v399 = vlaneseq
        %v400 = vshrl.u32 %v399, 7
        %v401 = vsub.s32 0, %v400
        %v402 = vrot.slane %v316, %v401
        %vm404 = vcmask 523264
        %v406 = vsel %vm404, %v397, 0
        %408 = vmatprep.subr.mxu0 0.0
        %409 = vmatpush1.msra.mxu0 %v308
        %410 = vmatprep.subr.mxu0 0.0
        %411 = vmatpush1.msra.mxu0 %v309
        %412 = vmatprep.subr.mxu0 0.0
        %413 = vmatpush1.msra.mxu0 %v310
        %414 = vmatprep.subr.mxu0 0.0
        %415 = vmatpush1.msra.mxu0 %v311
        %416 = vmatprep.subr.mxu0 0.0
        %417 = vmatpush1.msra.mxu0 %v312
        %418 = vmatprep.subr.mxu0 0.0
        %419 = vmatpush1.msra.mxu0 %v313
        %420 = vmatprep.subr.mxu0 0.0
        %421 = vmatpush1.msra.mxu0 %v314
        %422 = vmatprep.subr.mxu0 0.0
        %423 = vmatpush1.msra.mxu0 %v315
        %424 = vmatprep.subr.mxu0 0.0
        %425 = vmatpush1.msra.mxu0 0.0
        %426 = vmatprep.subr.mxu0 0.0
        %427 = vmatpush1.msra.mxu0 0.0
        %428 = vmatprep.subr.mxu0 0.0
        %429 = vmatpush1.msra.mxu0 0.0
        %430 = vmatprep.subr.mxu0 0.0
        %431 = vmatpush1.msra.mxu0 0.0
        %432 = vmatprep.subr.mxu0 0.0
        %433 = vmatpush1.msra.mxu0 0.0
        %434 = vmatprep.subr.mxu0 0.0
        %435 = vmatpush1.msra.mxu0 0.0
        %436 = vmatprep.subr.mxu0 0.0
        %437 = vmatpush1.msra.mxu0 0.0
        %438 = vmatprep.subr.mxu0 0.0
        %439 = vmatpush1.msra.mxu0 0.0
        %440 = vmatprep.subr.mxu0 0.0
        %441 = vmatpush1.msra.mxu0 0.0
        %442 = vmatprep.subr.mxu0 0.0
        %443 = vmatpush1.msra.mxu0 0.0
        %444 = vmatprep.subr.mxu0 0.0
        %445 = vmatpush1.msra.mxu0 0.0
        %446 = vmatprep.subr.mxu0 0.0
        %447 = vmatpush1.msra.mxu0 0.0
        %448 = vmatprep.subr.mxu0 0.0
        %449 = vmatpush1.msra.mxu0 0.0
        %450 = vmatprep.subr.mxu0 0.0
        %451 = vmatpush1.msra.mxu0 0.0
        %452 = vmatprep.subr.mxu0 0.0
        %453 = vmatpush1.msra.mxu0 0.0
        %454 = vmatprep.subr.mxu0 0.0
        %455 = vmatpush1.msra.mxu0 0.0
        %456 = vmatprep.subr.mxu0 0.0
        %457 = vmatpush1.msra.mxu0 0.0
        %458 = vmatprep.subr.mxu0 0.0
        %459 = vmatpush1.msra.mxu0 0.0
        %460 = vmatprep.subr.mxu0 0.0
        %461 = vmatpush1.msra.mxu0 0.0
        %462 = vmatprep.subr.mxu0 0.0
        %463 = vmatpush1.msra.mxu0 0.0
        %464 = vmatprep.subr.mxu0 0.0
        %465 = vmatpush1.msra.mxu0 0.0
        %466 = vmatprep.subr.mxu0 0.0
        %467 = vmatpush1.msra.mxu0 0.0
        %468 = vmatprep.subr.mxu0 0.0
        %469 = vmatpush1.msra.mxu0 0.0
        %470 = vmatprep.subr.mxu0 0.0
        %471 = vmatpush1.msra.mxu0 0.0
        %472 = vmatprep.mubr.f32.mxu0 0.0
        %473 = vmatmul.mubr.f32.gmra.mrb[0].mxu0 %v406
        %v474 = vpop.f32.mrb[0].mxu0
        %v475 = vadd.f32 %v402, %v474
        %v476 = vpop.f32.mrb[0].mxu0
        %477 = vdwg.mxu0
        %v478 = vmax.f32 %v475, 0.0
        %v479 = vld [vmem:[#allocation5] sm:$0xff]
        %v480 = vld [vmem:[#allocation5 + $0x8] sm:$0xff]
        %v481 = vld [vmem:[#allocation5 + $0x10] sm:$0xff]
        %v482 = vld [vmem:[#allocation5 + $0x18] sm:$0xff]
        %v483 = vld [vmem:[#allocation5 + $0x20] sm:$0xff]
        %v484 = vld [vmem:[#allocation5 + $0x28] sm:$0xff]
        %v485 = vld [vmem:[#allocation5 + $0x30] sm:$0xff]
        %v486 = vld [vmem:[#allocation5 + $0x38] sm:$0xff]
        %v487 = vld [vmem:[%s6] sm:$0x1]
        %v489 = vlaneseq
        %v490 = vshrl.u32 %v489, 7
        %v491 = vsub.s32 0, %v490
        %v492 = vrot.slane %v487, %v491
        %v495 = vsel %vm404, %v478, 0
        %497 = vmatprep.subr.mxu0 0.0
        %498 = vmatpush1.msra.mxu0 %v479
        %499 = vmatprep.subr.mxu0 0.0
        %500 = vmatpush1.msra.mxu0 %v480
        %501 = vmatprep.subr.mxu0 0.0
        %502 = vmatpush1.msra.mxu0 %v481
        %503 = vmatprep.subr.mxu0 0.0
        %504 = vmatpush1.msra.mxu0 %v482
        %505 = vmatprep.subr.mxu0 0.0
        %506 = vmatpush1.msra.mxu0 %v483
        %507 = vmatprep.subr.mxu0 0.0
        %508 = vmatpush1.msra.mxu0 %v484
        %509 = vmatprep.subr.mxu0 0.0
        %510 = vmatpush1.msra.mxu0 %v485
        %511 = vmatprep.subr.mxu0 0.0
        %512 = vmatpush1.msra.mxu0 %v486
        %513 = vmatprep.subr.mxu0 0.0
        %514 = vmatpush1.msra.mxu0 0.0
        %515 = vmatprep.subr.mxu0 0.0
        %516 = vmatpush1.msra.mxu0 0.0
        %517 = vmatprep.subr.mxu0 0.0
        %518 = vmatpush1.msra.mxu0 0.0
        %519 = vmatprep.subr.mxu0 0.0
        %520 = vmatpush1.msra.mxu0 0.0
        %521 = vmatprep.subr.mxu0 0.0
        %522 = vmatpush1.msra.mxu0 0.0
        %523 = vmatprep.subr.mxu0 0.0
        %524 = vmatpush1.msra.mxu0 0.0
        %525 = vmatprep.subr.mxu0 0.0
        %526 = vmatpush1.msra.mxu0 0.0
        %527 = vmatprep.subr.mxu0 0.0
        %528 = vmatpush1.msra.mxu0 0.0
        %529 = vmatprep.subr.mxu0 0.0
        %530 = vmatpush1.msra.mxu0 0.0
        %531 = vmatprep.subr.mxu0 0.0
        %532 = vmatpush1.msra.mxu0 0.0
        %533 = vmatprep.subr.mxu0 0.0
        %534 = vmatpush1.msra.mxu0 0.0
        %535 = vmatprep.subr.mxu0 0.0
        %536 = vmatpush1.msra.mxu0 0.0
        %537 = vmatprep.subr.mxu0 0.0
        %538 = vmatpush1.msra.mxu0 0.0
        %539 = vmatprep.subr.mxu0 0.0
        %540 = vmatpush1.msra.mxu0 0.0
        %541 = vmatprep.subr.mxu0 0.0
        %542 = vmatpush1.msra.mxu0 0.0
        %543 = vmatprep.subr.mxu0 0.0
        %544 = vmatpush1.msra.mxu0 0.0
        %545 = vmatprep.subr.mxu0 0.0
        %546 = vmatpush1.msra.mxu0 0.0
        %547 = vmatprep.subr.mxu0 0.0
        %548 = vmatpush1.msra.mxu0 0.0
        %549 = vmatprep.subr.mxu0 0.0
        %550 = vmatpush1.msra.mxu0 0.0
        %551 = vmatprep.subr.mxu0 0.0
        %552 = vmatpush1.msra.mxu0 0.0
        %553 = vmatprep.subr.mxu0 0.0
        %554 = vmatpush1.msra.mxu0 0.0
        %555 = vmatprep.subr.mxu0 0.0
        %556 = vmatpush1.msra.mxu0 0.0
        %557 = vmatprep.subr.mxu0 0.0
        %558 = vmatpush1.msra.mxu0 0.0
        %559 = vmatprep.subr.mxu0 0.0
        %560 = vmatpush1.msra.mxu0 0.0
        %561 = vmatprep.mubr.f32.mxu0 0.0
        %562 = vmatmul.mubr.f32.gmra.mrb[0].mxu0 %v495
        %v563 = vpop.f32.mrb[0].mxu0
        %v564 = vadd.f32 %v492, %v563
        %v565 = vpop.f32.mrb[0].mxu0
        %566 = vdwg.mxu0
        %v567 = vlaneseq
        %v568 = vand.u32 %v567, 127
        %vm569 = vcmp.lt.s32.totalorder %v568, 4
        %v570 = vsel %vm569, %v564, -inf
        %571 = vmax.xlane.f32.xlu0 %v570
        %v572 = vpop.xlane.xlu0 %571
        %v573 = vsub.f32 %v570, %v572
        %v574 = vmul.f32 %v573, 1.442695
        %v575 = vpow.pop %v574
        %v576 = vsel %vm569, %v575, 0.0
        %577 = vadd.xlane.f32.xlu0 %v576
        %v578 = vpop.xlane.xlu0 %577
        %v579 = vrcp.pop %v578
        %v580 = vmul.f32 %v576, %v579
        %581 = vst [vmem:[%s299] sm:$0xff] %v580
        %s582 = sand.u32 %s183, 1
        %s583 = scalar_lea.sflag [#allocation4], %s582
        %s584 = sand.u32 %s183, 1
        %s585 = smul.addr %s584, 8
        %s586 = scalar_lea.vmem [#allocation7], %s585
        // Predicated region
        $region57: #{tpu_custom_call.1} parent=47 // pred_check
          %p587 = pneg %p193
        $region58: #{tpu_custom_call.1} parent=47 // pred_check_branch
          %589 = sbr.rel (%p587) target = $region60
        $region59: #{tpu_custom_call.1} parent=47 // pred_region
          %s591 = ssub.s32 128, 128
          %592 = vsyncadd %s583, %s591
          %s593 = smul.addr %s23, 128
          %s594 = scalar_lea.hbm %s7, %s593
          %s596 = sshll.u32 %s586, 4
          %s597 = int_to_ptr.vmem [resolvable:$true] %s596
          %599 = dma.vmem_to_hbm [thread:$0]  %s597, 128, %s594, %s583
        $region60: #{tpu_custom_call.1} parent=47 // pred_fallthru
          _
      $region48: #{tpu_custom_call.1} parent=5 // pred_fallthru
        _
      %p600 = scmp.le.s32.totalorder 2, %s18
      // Predicated region
      $region61: #{tpu_custom_call.1} parent=5 // pred_check
        %p601 = pneg %p600
      $region62: #{tpu_custom_call.1} parent=5 // pred_check_branch
        %603 = sbr.rel (%p601) target = $region64
      $region63: #{tpu_custom_call.1} parent=5 // pred_region
        %s604 = ssub.s32 %s18, 2
        // Predicated region
        $region65: #{tpu_custom_call.1} parent=63 // pred_check
          %p605 = pneg %p199
        $region66: #{tpu_custom_call.1} parent=63 // pred_check_branch
          %607 = sbr.rel (%p605) target = $region68
        $region67: #{tpu_custom_call.1} parent=63 // pred_region
          %s608 = sand.u32 %s184, 1
          %s609 = scalar_lea.sflag [#allocation4], %s608
          %s610 = sand.u32 %s184, 1
          %s611 = smul.addr %s610, 8
          %s612 = scalar_lea.vmem [#allocation7], %s611
          %613 = dma.done %s609, 128
        $region68: #{tpu_custom_call.1} parent=63 // pred_fallthru
          _
      $region64: #{tpu_custom_call.1} parent=5 // pred_fallthru
        _
    $region6: #{tpu_custom_call.1} parent=1 // loop_footer
      %s22 = sadd.s32 1, %s18
    $region7: #{tpu_custom_call.1} parent=1 // loop_footer_branch
      %17 = sbr.rel target = $region3
    $region8: #{tpu_custom_call.1} parent=1 // loop_exit
      _
    %614 = vsyncpa [#allocation3], 1
    %s615 = scalar_lea.sflag [#allocation3], 1
    %616 = vsyncpa %s615, 1
    %617 = vsyncpa [#allocation6], 1
    %618 = vsyncpa [#allocation4], 1
    %s619 = scalar_lea.sflag [#allocation4], 1
    %620 = vsyncpa %s619, 1

</llo_original>
